<compile_context>
chip_gen: v7x
topology: tpu7x:2x2x1
jax: 0.10.0
libtpu: 0.0.40
codegen_flags: <defaults>
</compile_context>

<pallas_src>
import jax
import jax.numpy as jnp
from jax.experimental import pallas as pl
from jax.experimental.pallas import tpu as pltpu


_LANE = 128
_TM_CAP = 1024     # row tile cap (sublane axis)
_TN_CAP = 2048     # feature tile cap (lane axis)
_SMALL_FALLBACK_ELEMS = 64 * 1024


def _round_up(a, b):
    return pl.cdiv(a, b) * b


def _linear_bias_kernel(x_ref, w_ref, b_ref, o_ref):
    # x_ref: (TM, d), w_ref: (d, TN), b_ref: (1, TN), o_ref: (TM, TN)
    acc = jnp.dot(x_ref[...], w_ref[...], preferred_element_type=jnp.float32)
    acc = acc + b_ref[...].astype(jnp.float32)   # broadcast over rows == bias.unsqueeze(-2)
    o_ref[...] = acc.astype(o_ref.dtype)


def _linear_kernel(x_ref, w_ref, o_ref):
    acc = jnp.dot(x_ref[...], w_ref[...], preferred_element_type=jnp.float32)
    o_ref[...] = acc.astype(o_ref.dtype)


def _vmem_cap_bytes():
    # Generation-aware scoped-VMEM cap (64 MiB/TC on v7x, 128 MiB on v5e/v6e).
    try:
        return int(0.7 * pltpu.get_tpu_info().vmem_capacity_bytes)
    except Exception:
        return 48 * 1024 * 1024


def _pallas_linear(x2, w_t, b2=None):
    """out = x2 @ w_t (+ b2).  x2: (m, d), w_t: (d, n), b2: (1, n) or None."""
    m, d = x2.shape
    d_w, n = w_t.shape
    assert d_w == d
    out_dtype = x2.dtype
    itemsize = jnp.dtype(x2.dtype).itemsize
    out_itemsize = jnp.dtype(out_dtype).itemsize
    row_align = {4: 8, 2: 16, 1: 32}.get(itemsize, 8)

    # Lane handling: pad ONLY when n < 128 (otherwise every tile would take
    # masked partial stores). For n >= 128 write the exact (m, n) output; only
    # the final ragged j tile (if any) uses masked stores.
    n_store = n
    if n < _LANE:
        w_t = jnp.pad(w_t, ((0, 0), (0, _LANE - n)))
        if b2 is not None:
            b2 = jnp.pad(b2, ((0, 0), (0, _LANE - n)))
        n_store = _LANE

    tn = min(_TN_CAP, _round_up(n_store, _LANE))
    tm = min(_TM_CAP, _round_up(m, row_align))
    n_tiles = pl.cdiv(n_store, tn)
    m_tiles = pl.cdiv(m, tm)

    # v7x megacore: ensure >= 2 grid blocks so both TensorCores get work
    # (harmless on single-core v5e/v6e).
    if n_tiles * m_tiles == 1 and m > row_align:
        tm = _round_up(pl.cdiv(m, 2), row_align)
        m_tiles = pl.cdiv(m, tm)

    # Row axis innermost -> the (d, tn) weight tile stays VMEM-resident across
    # row steps (its block index depends only on the outer j axis).
    grid = (n_tiles, m_tiles)

    # Double-buffered per-step VMEM footprint + headroom, clamped to the chip.
    est = (2 * tm * d * itemsize                        # x tiles
           + 2 * d * tn * itemsize                      # weight tiles
           + (2 * tn * itemsize if b2 is not None else 0)
           + 2 * tm * tn * out_itemsize                 # output tiles
           + tm * tn * 4)                               # f32 matmul temporary
    vmem_limit = int(min(max(2 * est, 16 * 1024 * 1024), _vmem_cap_bytes()))

    compiler_params = pltpu.CompilerParams(
        dimension_semantics=("parallel", "parallel"),
        vmem_limit_bytes=vmem_limit,
    )
    cost = pl.CostEstimate(
        flops=2 * m * n_store * d,
        transcendentals=0,
        bytes_accessed=int((m * d + d * n_store
                            + (n_store if b2 is not None else 0)) * itemsize
                           + m * n_store * out_itemsize),
    )

    out_shape = jax.ShapeDtypeStruct((m, n_store), out_dtype)
    x_spec = pl.BlockSpec((tm, d), lambda j, i: (i, 0))
    w_spec = pl.BlockSpec((d, tn), lambda j, i: (0, j))
    o_spec = pl.BlockSpec((tm, tn), lambda j, i: (i, j))

    if b2 is not None:
        b_spec = pl.BlockSpec((1, tn), lambda j, i: (0, j))
        out = pl.pallas_call(
            _linear_bias_kernel,
            out_shape=out_shape,
            grid=grid,
            in_specs=[x_spec, w_spec, b_spec],
            out_specs=o_spec,
            compiler_params=compiler_params,
            cost_estimate=cost,
        )(x2, w_t, b2)
    else:
        out = pl.pallas_call(
            _linear_kernel,
            out_shape=out_shape,
            grid=grid,
            in_specs=[x_spec, w_spec],
            out_specs=o_spec,
            compiler_params=compiler_params,
            cost_estimate=cost,
        )(x2, w_t)

    if n_store != n:            # only the tiny n < 128 case pays a tail slice
        out = out[:, :n]
    return out


def fourier_feature_map(x, weight, bias=None, *, force_pallas=False):
    """Pallas implementation of FourierFeatureMap.forward.

    x:      (..., d)
    weight: (n_features, d)
    bias:   (n_features,) or None
    returns (..., n_features)
    """
    *batch_dims, d = x.shape
    n_feat, d_w = weight.shape
    assert d_w == d

    x2 = x.reshape(-1, d)       # glue: flatten batch dims into rows
    m = x2.shape[0]

    # Small problems: the Pallas call is pure fixed overhead; let XLA fuse it.
    if not force_pallas and m * n_feat < _SMALL_FALLBACK_ELEMS:
        out = x2 @ weight.T
        if bias is not None:
            out = out + bias[None, :]
        return out.astype(x.dtype).reshape(*batch_dims, n_feat)

    w_t = weight.T
    b2 = None if bias is None else bias.reshape(1, n_feat)
    out = _pallas_linear(x2, w_t, b2)
    return out.reshape(*batch_dims, n_feat)


class PallasFeatureMapList:
    """Pallas counterpart of FeatureMapList.

    The list forward is fused into ONE pallas_call: every map's weight is
    pre-transposed, lane-padded to a 128 multiple and concatenated along the
    feature axis at construction time (hoisted out of the forward path), so x
    is read from HBM exactly once; per-map outputs are split at 128-aligned
    lane offsets in the wrapper.
    """
    # TODO(synk): device/dtype colocation checks and input/output transforms of
    # the torch module are host-side bookkeeping with no kernel equivalent.

    def __init__(self, feature_maps):
        self.feature_maps = list(feature_maps)
        assert len(self.feature_maps) > 0
        d = self.feature_maps[0][0].shape[1]
        any_bias = any(b is not None for _, b in self.feature_maps)
        segs, w_parts, b_parts = [], [], []
        off = 0
        for w, b in self.feature_maps:
            n_i, d_i = w.shape
            assert d_i == d, "feature maps must share the input dimension"
            p_i = max(_LANE, _round_up(n_i, _LANE))
            w_parts.append(jnp.pad(w.T, ((0, 0), (0, p_i - n_i))))
            if any_bias:
                b_i = jnp.zeros((n_i,), w.dtype) if b is None else b
                b_parts.append(jnp.pad(b_i.reshape(1, n_i), ((0, 0), (0, p_i - n_i))))
            segs.append((off, n_i))
            off += p_i
        self._d = d
        self._segments = segs
        self._n_total = off
        self._w_t = jnp.concatenate(w_parts, axis=1)            # (d, n_total)
        self._b2 = jnp.concatenate(b_parts, axis=1) if any_bias else None

    def __iter__(self):
        return iter(self.feature_maps)

    def __len__(self):
        return len(self.feature_maps)

    def __getitem__(self, i):
        return self.feature_maps[i]

    def __call__(self, x, *, force_pallas=False):
        *batch_dims, d = x.shape
        assert d == self._d
        x2 = x.reshape(-1, d)
        m = x2.shape[0]
        if not force_pallas and m * self._n_total < _SMALL_FALLBACK_ELEMS:
            return [fourier_feature_map(x, w, b) for (w, b) in self.feature_maps]
        fused = _pallas_linear(x2, self._w_t, self._b2)          # (m, n_total)
        return [fused[:, off:off + n_i].reshape(*batch_dims, n_i)
                for (off, n_i) in self._segments]


if __name__ == "__main__":
    key = jax.random.PRNGKey(0)
    k_x, k_w1, k_b1, k_w2, k_x2 = jax.random.split(key, 5)

    # --- Test 1: small shapes consistent with the module; force the Pallas path
    #     (exercises n_feat < 128 lane padding + forced 2-block row grid). ---
    batch, n, d, n_features = 2, 8, 16, 32
    x = jax.random.normal(k_x, (batch, n, d), dtype=jnp.float32)
    weight1 = jax.random.normal(k_w1, (n_features, d), dtype=jnp.float32)
    bias1 = jax.random.uniform(k_b1, (n_features,), dtype=jnp.float32)

    out = jax.block_until_ready(
        fourier_feature_map(x, weight1, bias1, force_pallas=True))
    ref = x @ weight1.T + bias1[None, None, :]
    assert out.shape == (batch, n, n_features)
    assert jnp.allclose(out, ref, atol=5e-5, rtol=5e-5)

    # --- Test 2: exercises exact-shape output with ragged row blocks (600 rows)
    #     and a ragged lane tile (200 features, tn=256), no-bias path. ---
    n2, n_features2 = 300, 200
    xb = jax.random.normal(k_x2, (batch, n2, d), dtype=jnp.float32)
    weight2 = jax.random.normal(k_w2, (n_features2, d), dtype=jnp.float32)

    out2 = jax.block_until_ready(fourier_feature_map(xb, weight2, None))
    ref2 = xb @ weight2.T
    assert out2.shape == (batch, n2, n_features2)
    assert jnp.allclose(out2, ref2, atol=5e-5, rtol=5e-5)

    # --- Test 3: FeatureMapList.forward — fused single-GEMM path, mixed
    #     bias / no-bias maps, outputs split per map. ---
    fmap_list = PallasFeatureMapList([(weight1, bias1), (weight2, None)])
    outs = fmap_list(x, force_pallas=True)
    outs = [jax.block_until_ready(o) for o in outs]
    assert isinstance(outs, list) and len(outs) == 2
    assert outs[0].shape == (batch, n, n_features)
    assert outs[1].shape == (batch, n, n_features2)
    assert jnp.allclose(outs[0], x @ weight1.T + bias1, atol=5e-5, rtol=5e-5)
    assert jnp.allclose(outs[1], x @ weight2.T, atol=5e-5, rtol=5e-5)

    # --- Test 4: larger list forward on the big batch (default Pallas path). ---
    outs_b = fmap_list(xb)
    outs_b = [jax.block_until_ready(o) for o in outs_b]
    assert jnp.allclose(outs_b[0], xb @ weight1.T + bias1, atol=5e-5, rtol=5e-5)
    assert jnp.allclose(outs_b[1], xb @ weight2.T, atol=5e-5, rtol=5e-5)

    print("KERNEL_OK")
</pallas_src>

<mosaic_0001>
module attributes {stable_mosaic.version = 11 : i64} {
  func.func @_linear_bias_kernel(%arg0: i32, %arg1: i32, %arg2: memref<8x16xf32, #tpu.memory_space<vmem>>, %arg3: memref<16x128xf32, #tpu.memory_space<vmem>>, %arg4: memref<1x128xf32, #tpu.memory_space<vmem>>, %arg5: memref<8x128xf32, #tpu.memory_space<vmem>>) attributes {dimension_semantics = [#tpu.dimension_semantics<parallel>, #tpu.dimension_semantics<parallel>], iteration_bounds = array<i64: 1, 2>, scalar_prefetch = 0 : i64, scratch_operands = 0 : i64, tpu.core_type = #tpu.core_type<tc>, window_params = [{transform_indices = @transform_0, window_bounds = array<i64: 8, 16>}, {transform_indices = @transform_1, window_bounds = array<i64: 16, 128>}, {transform_indices = @transform_2, window_bounds = array<i64: 1, 128>}, {transform_indices = @transform_3, window_bounds = array<i64: 8, 128>}]} {
    %c0 = arith.constant 0 : index
    %c0_0 = arith.constant 0 : index
    %0 = vector.load %arg2[%c0, %c0_0] : memref<8x16xf32, #tpu.memory_space<vmem>>, vector<8x16xf32>
    %c0_1 = arith.constant 0 : index
    %c0_2 = arith.constant 0 : index
    %1 = vector.load %arg3[%c0_1, %c0_2] : memref<16x128xf32, #tpu.memory_space<vmem>>, vector<16x128xf32>
    %cst = arith.constant dense<0.000000e+00> : vector<8x128xf32>
    %2 = tpu.matmul %0, %1, %cst {dimension_numbers = #tpu.dot_dimension_numbers<[1], [0], [0], [1], [0, 0, 1, 1], [], []>} : vector<8x16xf32>, vector<16x128xf32>, vector<8x128xf32> -> vector<8x128xf32>
    %c0_3 = arith.constant 0 : index
    %c0_4 = arith.constant 0 : index
    %3 = vector.load %arg4[%c0_3, %c0_4] : memref<1x128xf32, #tpu.memory_space<vmem>>, vector<1x128xf32>
    %4 = vector.broadcast %3 : vector<1x128xf32> to vector<8x128xf32>
    %5 = arith.addf %2, %4 : vector<8x128xf32>
    %c0_5 = arith.constant 0 : index
    %c0_6 = arith.constant 0 : index
    %6 = vector.load %arg5[%c0_5, %c0_6] : memref<8x128xf32, #tpu.memory_space<vmem>>, vector<8x128xf32>
    tpu.vector_store %arg5[%c0_5, %c0_6], %5 {strides = array<i32>} : memref<8x128xf32, #tpu.memory_space<vmem>>, vector<8x128xf32>,
    return
  }
  func.func @transform_0(%arg0: i32, %arg1: i32) -> (i32, i32) {
    %c0_i32 = arith.constant 0 : i32
    %c0_i32_0 = arith.constant 0 : i32
    return %arg1, %c0_i32 : i32, i32
  }
  func.func @transform_1(%arg0: i32, %arg1: i32) -> (i32, i32) {
    %c0_i32 = arith.constant 0 : i32
    %c0_i32_0 = arith.constant 0 : i32
    return %c0_i32, %arg0 : i32, i32
  }
  func.func @transform_2(%arg0: i32, %arg1: i32) -> (i32, i32) {
    %c0_i32 = arith.constant 0 : i32
    %c0_i32_0 = arith.constant 0 : i32
    return %c0_i32, %arg0 : i32, i32
  }
  func.func @transform_3(%arg0: i32, %arg1: i32) -> (i32, i32) {
    %c0_i32 = arith.constant 0 : i32
    return %arg1, %arg0 : i32, i32
  }
}

</mosaic_0001>

<llo_original>
// kernel: tpu_custom_call.1
$region0: #{tpu_custom_call.1}
  #allocation0 [shape = 'u32[]', space=smem, size = 0x4, offset = 0x4, fixed_abs, tag = 'smem constant byte address 0x4 - core index']
  #allocation1 [shape = 'u32[144,128]{1,0:T(1,128)}', space=vmem, size = 0x12000, scoped, tag = 'internal scratch']
  %s0 = inlined_call_operand.hbm [shape: f32[16,16], index: 0, kind: input, shape index: {}]
  %s1 = inlined_call_operand.hbm [shape: f32[16,128], index: 1, kind: input, shape index: {}]
  %s2 = inlined_call_operand.vmem [shape: f32[1,128], index: 2, kind: input, shape index: {}]
  %s3 = inlined_call_operand.hbm [shape: f32[16,128], index: 3, kind: output, shape index: {}]
  %s4 = sld [smem:[#allocation0]]
  $region53: #{tpu_custom_call.1} parent=0
    _
  %s6 = ssub.s32 1, %s4
  %s7 = scalar_select 0, %s6, %s4
  $region1: #{tpu_custom_call.1} parent=0
    #allocation2 [shape = 'u8[8192]{0}', space=vmem, size = 0x2000, scoped, tag = 'input window, operand 0']
    #allocation3 [shape = 's32[2]{0}', space=sflag, size = 0x8, scoped, tag = 'scoped memory for tpu_custom_call.1']
    #allocation4 [shape = 's32[2]{0}', space=sflag, size = 0x8, scoped, tag = 'scoped memory for tpu_custom_call.1']
    #allocation5 [shape = 'u8[8192]{0}', space=vmem, size = 0x2000, scoped, tag = 'input window, operand 1, single buffered']
    #allocation6 [shape = 's32[1]{0}', space=sflag, size = 0x4, scoped, tag = 'scoped memory for tpu_custom_call.1']
    #allocation7 [shape = 'u8[8192]{0}', space=vmem, size = 0x2000, scoped, tag = 'output window, operand 0']
    %8 = vsyncpa [#allocation3], 0
    %s9 = scalar_lea.sflag [#allocation3], 1
    %10 = vsyncpa %s9, 0
    %11 = vsyncpa [#allocation6], 0
    %12 = vsyncpa [#allocation4], 0
    %s13 = scalar_lea.sflag [#allocation4], 1
    %14 = vsyncpa %s13, 0
    loop: start=0, step=1, limit=4
    $region2: #{tpu_custom_call.1} parent=1 // loop_pre_header
      _
    $region3: #{tpu_custom_call.1} parent=1 // loop_header
      %s16 = sphi 0, %s20
      %p17 = scmp.ge.s32.totalorder %s16, 4
      %s23 = sphi 0, %s35
      %s24 = sphi 0, %s31
      %s25 = sphi 0, %s23
      %s26 = sphi 0, %s24
      %s27 = sphi 0, %s25
      %s28 = sphi 0, %s26
      %s38 = sphi 0, %s40
      %s41 = sphi 0, %s38
      %s42 = sphi 0, %s41
      %s58 = sphi 0, %s42
      %s64 = sphi 0, %s66
      %s67 = sphi 0, %s64
      %s68 = sphi 0, %s67
      %s84 = sphi 0, %s68
      %s90 = sphi 0, %s92
      %s93 = sphi 0, %s90
      %s94 = sphi 0, %s93
      %s110 = sphi 0, %s94
      %s118 = sphi 0, %s120
      %s121 = sphi 0, %s118
      %s122 = sphi 0, %s121
      %s138 = sphi 0, %s122
    $region4: #{tpu_custom_call.1} parent=1 // loop_header_branch
      %19 = sbr.rel (%p17) target = $region8
    $region5: #{tpu_custom_call.1} parent=1 // loop_body
      %s21 = ssub.s32 %s16, 1
      %s22 = ssub.s32 %s16, 2
      %s29 = sadd.s32 1, %s24
      %p30 = scmp.ge.s32.totalorder %s29, 2
      %s31 = scalar_select %p30, 0, %s29
      %s32 = sadd.s32 1, %s23
      %s33 = scalar_select %p30, %s32, %s23
      %p34 = scmp.ge.s32.totalorder %s33, 1
      %s35 = scalar_select %p34, 0, %s33
      %s36 = ssub.s32 %s24, %s31
      %p37 = scmp.eq.s32.totalorder %s36, 0
      %s39 = sadd.s32 %s38, 1
      %s40 = scalar_select %p37, %s38, %s39
      %p43 = pneg %p37
      %p44 = scmp.eq.s32.totalorder %s16, 1
      %p45 = por %p43, %p44
      %p46 = scmp.ne.s32.totalorder %s38, %s41
      %p47 = scmp.eq.s32.totalorder %s16, 0
      %p48 = por %p46, %p47
      %p49 = scmp.ne.s32.totalorder %s38, %s41
      %p50 = scmp.eq.s32.totalorder %s21, 1
      %p51 = por %p49, %p50
      %p52 = scmp.ne.s32.totalorder %s41, %s42
      %p53 = scmp.eq.s32.totalorder %s21, 0
      %p54 = por %p52, %p53
      %p55 = scmp.ne.s32.totalorder %s41, %s42
      %p56 = scmp.eq.s32.totalorder %s22, 1
      %p57 = por %p55, %p56
      %p59 = scmp.ne.s32.totalorder %s42, %s58
      %p60 = scmp.eq.s32.totalorder %s22, 0
      %p61 = por %p59, %p60
      %s62 = ssub.s32 %s23, %s35
      %p63 = scmp.eq.s32.totalorder %s62, 0
      %s65 = sadd.s32 %s64, 1
      %s66 = scalar_select %p63, %s64, %s65
      %p69 = pneg %p63
      %p70 = scmp.eq.s32.totalorder %s16, 1
      %p71 = por %p69, %p70
      %p72 = scmp.ne.s32.totalorder %s64, %s67
      %p73 = scmp.eq.s32.totalorder %s16, 0
      %p74 = por %p72, %p73
      %p75 = scmp.ne.s32.totalorder %s64, %s67
      %p76 = scmp.eq.s32.totalorder %s21, 1
      %p77 = por %p75, %p76
      %p78 = scmp.ne.s32.totalorder %s67, %s68
      %p79 = scmp.eq.s32.totalorder %s21, 0
      %p80 = por %p78, %p79
      %p81 = scmp.ne.s32.totalorder %s67, %s68
      %p82 = scmp.eq.s32.totalorder %s22, 1
      %p83 = por %p81, %p82
      %p85 = scmp.ne.s32.totalorder %s68, %s84
      %p86 = scmp.eq.s32.totalorder %s22, 0
      %p87 = por %p85, %p86
      %s88 = ssub.s32 %s23, %s35
      %p89 = scmp.eq.s32.totalorder %s88, 0
      %s91 = sadd.s32 %s90, 1
      %s92 = scalar_select %p89, %s90, %s91
      %p95 = pneg %p89
      %p96 = scmp.eq.s32.totalorder %s16, 1
      %p97 = por %p95, %p96
      %p98 = scmp.ne.s32.totalorder %s90, %s93
      %p99 = scmp.eq.s32.totalorder %s16, 0
      %p100 = por %p98, %p99
      %p101 = scmp.ne.s32.totalorder %s90, %s93
      %p102 = scmp.eq.s32.totalorder %s21, 1
      %p103 = por %p101, %p102
      %p104 = scmp.ne.s32.totalorder %s93, %s94
      %p105 = scmp.eq.s32.totalorder %s21, 0
      %p106 = por %p104, %p105
      %p107 = scmp.ne.s32.totalorder %s93, %s94
      %p108 = scmp.eq.s32.totalorder %s22, 1
      %p109 = por %p107, %p108
      %p111 = scmp.ne.s32.totalorder %s94, %s110
      %p112 = scmp.eq.s32.totalorder %s22, 0
      %p113 = por %p111, %p112
      %s114 = ssub.s32 %s24, %s31
      %s115 = ssub.s32 %s23, %s35
      %s116 = sor.u32 %s114, %s115
      %p117 = scmp.eq.s32.totalorder %s116, 0
      %s119 = sadd.s32 %s118, 1
      %s120 = scalar_select %p117, %s118, %s119
      %p123 = pneg %p117
      %p124 = scmp.eq.s32.totalorder %s16, 1
      %p125 = por %p123, %p124
      %p126 = scmp.ne.s32.totalorder %s118, %s121
      %p127 = scmp.eq.s32.totalorder %s16, 0
      %p128 = por %p126, %p127
      %p129 = scmp.ne.s32.totalorder %s118, %s121
      %p130 = scmp.eq.s32.totalorder %s21, 1
      %p131 = por %p129, %p130
      %p132 = scmp.ne.s32.totalorder %s121, %s122
      %p133 = scmp.eq.s32.totalorder %s21, 0
      %p134 = por %p132, %p133
      %p135 = scmp.ne.s32.totalorder %s121, %s122
      %p136 = scmp.eq.s32.totalorder %s22, 1
      %p137 = por %p135, %p136
      %p139 = scmp.ne.s32.totalorder %s122, %s138
      %p140 = scmp.eq.s32.totalorder %s22, 0
      %p141 = por %p139, %p140
      %p142 = scmp.le.s32.totalorder 1, %s16
      %p143 = scmp.lt.s32.totalorder %s16, 3
      %p144 = pnand %p142, %p143
      %p145 = pneg %p144
      // Predicated region
      $region9: #{tpu_custom_call.1} parent=5 // pred_check
        _
      $region10: #{tpu_custom_call.1} parent=5 // pred_check_branch
        %147 = sbr.rel (%p144) target = $region12
      $region11: #{tpu_custom_call.1} parent=5 // pred_region
        %s148 = ssub.s32 %s16, 1
        // Predicated region
        $region13: #{tpu_custom_call.1} parent=11 // pred_check
          %p149 = pneg %p80
        $region14: #{tpu_custom_call.1} parent=11 // pred_check_branch
          %151 = sbr.rel (%p149) target = $region16
        $region15: #{tpu_custom_call.1} parent=11 // pred_region
          %s153 = ssub.s32 256, 256
          %154 = vsyncadd [#allocation6], %s153
          %s155 = smul.addr %s25, 128
          %s156 = scalar_lea.hbm %s1, %s155
          %s157 = sshll.u32 [#allocation5], 4
          %s158 = int_to_ptr.vmem [resolvable:$true] %s157
          %163 = dma.hbm_to_vmem [thread:$0]  %s156, 256, %s158, [#allocation6], 128, 128, 8
        $region16: #{tpu_custom_call.1} parent=11 // pred_fallthru
          _
        // Predicated region
        $region17: #{tpu_custom_call.1} parent=11 // pred_check
          %p164 = pneg %p106
        $region18: #{tpu_custom_call.1} parent=11 // pred_check_branch
          %166 = sbr.rel (%p164) target = $region20
        $region19: #{tpu_custom_call.1} parent=11 // pred_region
          %p167 = scmp.lt.s32.totalorder %s25, 0
          %s168 = scalar_select %p167, %s25, 0
          %s169 = scalar_lea.vmem %s2, %s168
        $region20: #{tpu_custom_call.1} parent=11 // pred_fallthru
          _
      $region12: #{tpu_custom_call.1} parent=5 // pred_fallthru
        _
      %p170 = scmp.lt.s32.totalorder %s16, 2
      // Predicated region
      $region21: #{tpu_custom_call.1} parent=5 // pred_check
        %p171 = pneg %p170
      $region22: #{tpu_custom_call.1} parent=5 // pred_check_branch
        %173 = sbr.rel (%p171) target = $region24
      $region23: #{tpu_custom_call.1} parent=5 // pred_region
        // Predicated region
        $region25: #{tpu_custom_call.1} parent=23 // pred_check
          %p174 = pneg %p48
        $region26: #{tpu_custom_call.1} parent=23 // pred_check_branch
          %176 = sbr.rel (%p174) target = $region28
        $region27: #{tpu_custom_call.1} parent=23 // pred_region
          %s177 = sand.u32 %s38, 1
          %s178 = scalar_lea.sflag [#allocation3], %s177
          %s179 = sand.u32 %s38, 1
          %s180 = smul.addr %s179, 8
          %s181 = scalar_lea.vmem [#allocation2], %s180
          %s183 = ssub.s32 128, 128
          %184 = vsyncadd %s178, %s183
          %s185 = smul.addr %s24, 128
          %s186 = scalar_lea.hbm %s0, %s185
          %s188 = sshll.u32 %s181, 4
          %s189 = int_to_ptr.vmem [resolvable:$true] %s188
          %191 = dma.hbm_to_vmem [thread:$0]  %s186, 128, %s189, %s178
        $region28: #{tpu_custom_call.1} parent=23 // pred_fallthru
          _
      $region24: #{tpu_custom_call.1} parent=5 // pred_fallthru
        _
      %p192 = scmp.le.s32.totalorder 1, %s16
      %p193 = scmp.lt.s32.totalorder %s16, 3
      %p194 = pnand %p192, %p193
      %p195 = pneg %p194
      // Predicated region
      $region29: #{tpu_custom_call.1} parent=5 // pred_check
        _
      $region30: #{tpu_custom_call.1} parent=5 // pred_check_branch
        %197 = sbr.rel (%p194) target = $region32
      $region31: #{tpu_custom_call.1} parent=5 // pred_region
        %s198 = ssub.s32 %s16, 1
        %s199 = sand.u32 %s41, 1
        %s200 = scalar_lea.sflag [#allocation3], %s199
        %s201 = sand.u32 %s41, 1
        %s202 = smul.addr %s201, 8
        %s203 = scalar_lea.vmem [#allocation2], %s202
        // Predicated region
        $region33: #{tpu_custom_call.1} parent=31 // pred_check
          %p204 = pneg %p54
        $region34: #{tpu_custom_call.1} parent=31 // pred_check_branch
          %206 = sbr.rel (%p204) target = $region36
        $region35: #{tpu_custom_call.1} parent=31 // pred_region
          %207 = dma.done %s200, 128
        $region36: #{tpu_custom_call.1} parent=31 // pred_fallthru
          _
        // Predicated region
        $region37: #{tpu_custom_call.1} parent=31 // pred_check
          %p208 = pneg %p80
        $region38: #{tpu_custom_call.1} parent=31 // pred_check_branch
          %210 = sbr.rel (%p208) target = $region40
        $region39: #{tpu_custom_call.1} parent=31 // pred_region
          %211 = dma.done [#allocation6], 256
        $region40: #{tpu_custom_call.1} parent=31 // pred_fallthru
          _
        %s212 = sand.u32 %s41, 1
        %s213 = scalar_lea.sflag [#allocation3], %s212
        %s214 = sand.u32 %s41, 1
        %s215 = smul.addr %s214, 8
        %s216 = scalar_lea.vmem [#allocation2], %s215
        %p217 = pneg %p54
        %p218 = pneg %p51
        %p219 = pneg %p80
        %p220 = pneg %p77
        %p221 = scmp.lt.s32.totalorder %s25, 0
        %s222 = scalar_select %p221, %s25, 0
        %s223 = scalar_lea.vmem %s2, %s222
        %p224 = pneg %p106
        %p225 = pneg %p103
        %p226 = pneg %p134
        %p227 = pneg %p131
        %s228 = sand.u32 %s121, 1
        %s229 = scalar_lea.sflag [#allocation4], %s228
        %s230 = sand.u32 %s121, 1
        %s231 = smul.addr %s230, 8
        %s232 = scalar_lea.vmem [#allocation7], %s231
        %p233 = scmp.lt.s32.totalorder %s25, 0
        %s234 = scalar_select %p233, %s25, 0
        %s235 = scalar_lea.vmem %s2, %s234
        %v236 = vld [vmem:[%s203] sm:$0xff]
        %v237 = vld [vmem:[#allocation5] sm:$0xff]
        %v238 = vld [vmem:[#allocation5 + $0x8] sm:$0xff]
        %v239 = vld [vmem:[%s235] sm:$0x1]
        %v241 = vlaneseq
        %v242 = vshrl.u32 %v241, 7
        %v243 = vsub.s32 0, %v242
        %v244 = vrot.slane %v239, %v243
        %vm246 = vcmask 130048
        %v248 = vsel %vm246, %v236, 0
        %250 = vmatprep.subr.mxu0 0.0
        %251 = vmatpush1.msra.mxu0 %v237
        %252 = vmatprep.subr.mxu0 0.0
        %253 = vmatpush1.msra.mxu0 %v238
        %254 = vmatprep.subr.mxu0 0.0
        %255 = vmatpush1.msra.mxu0 0.0
        %256 = vmatprep.subr.mxu0 0.0
        %257 = vmatpush1.msra.mxu0 0.0
        %258 = vmatprep.subr.mxu0 0.0
        %259 = vmatpush1.msra.mxu0 0.0
        %260 = vmatprep.subr.mxu0 0.0
        %261 = vmatpush1.msra.mxu0 0.0
        %262 = vmatprep.subr.mxu0 0.0
        %263 = vmatpush1.msra.mxu0 0.0
        %264 = vmatprep.subr.mxu0 0.0
        %265 = vmatpush1.msra.mxu0 0.0
        %266 = vmatprep.subr.mxu0 0.0
        %267 = vmatpush1.msra.mxu0 0.0
        %268 = vmatprep.subr.mxu0 0.0
        %269 = vmatpush1.msra.mxu0 0.0
        %270 = vmatprep.subr.mxu0 0.0
        %271 = vmatpush1.msra.mxu0 0.0
        %272 = vmatprep.subr.mxu0 0.0
        %273 = vmatpush1.msra.mxu0 0.0
        %274 = vmatprep.subr.mxu0 0.0
        %275 = vmatpush1.msra.mxu0 0.0
        %276 = vmatprep.subr.mxu0 0.0
        %277 = vmatpush1.msra.mxu0 0.0
        %278 = vmatprep.subr.mxu0 0.0
        %279 = vmatpush1.msra.mxu0 0.0
        %280 = vmatprep.subr.mxu0 0.0
        %281 = vmatpush1.msra.mxu0 0.0
        %282 = vmatprep.subr.mxu0 0.0
        %283 = vmatpush1.msra.mxu0 0.0
        %284 = vmatprep.subr.mxu0 0.0
        %285 = vmatpush1.msra.mxu0 0.0
        %286 = vmatprep.subr.mxu0 0.0
        %287 = vmatpush1.msra.mxu0 0.0
        %288 = vmatprep.subr.mxu0 0.0
        %289 = vmatpush1.msra.mxu0 0.0
        %290 = vmatprep.subr.mxu0 0.0
        %291 = vmatpush1.msra.mxu0 0.0
        %292 = vmatprep.subr.mxu0 0.0
        %293 = vmatpush1.msra.mxu0 0.0
        %294 = vmatprep.subr.mxu0 0.0
        %295 = vmatpush1.msra.mxu0 0.0
        %296 = vmatprep.subr.mxu0 0.0
        %297 = vmatpush1.msra.mxu0 0.0
        %298 = vmatprep.subr.mxu0 0.0
        %299 = vmatpush1.msra.mxu0 0.0
        %300 = vmatprep.subr.mxu0 0.0
        %301 = vmatpush1.msra.mxu0 0.0
        %302 = vmatprep.subr.mxu0 0.0
        %303 = vmatpush1.msra.mxu0 0.0
        %304 = vmatprep.subr.mxu0 0.0
        %305 = vmatpush1.msra.mxu0 0.0
        %306 = vmatprep.subr.mxu0 0.0
        %307 = vmatpush1.msra.mxu0 0.0
        %308 = vmatprep.subr.mxu0 0.0
        %309 = vmatpush1.msra.mxu0 0.0
        %310 = vmatprep.subr.mxu0 0.0
        %311 = vmatpush1.msra.mxu0 0.0
        %312 = vmatprep.subr.mxu0 0.0
        %313 = vmatpush1.msra.mxu0 0.0
        %314 = vmatprep.mubr.f32.mxu0 0.0
        %315 = vmatmul.mubr.f32.gmra.mrb[0].mxu0 %v248
        %v316 = vpop.f32.mrb[0].mxu0
        %v317 = vadd.f32 %v244, %v316
        %v318 = vpop.f32.mrb[0].mxu0
        %319 = vdwg.mxu0
        %320 = vst [vmem:[%s232] sm:$0xff] %v317
        %s321 = sand.u32 %s121, 1
        %s322 = scalar_lea.sflag [#allocation4], %s321
        %s323 = sand.u32 %s121, 1
        %s324 = smul.addr %s323, 8
        %s325 = scalar_lea.vmem [#allocation7], %s324
        // Predicated region
        $region41: #{tpu_custom_call.1} parent=31 // pred_check
          %p326 = pneg %p131
        $region42: #{tpu_custom_call.1} parent=31 // pred_check_branch
          %328 = sbr.rel (%p326) target = $region44
        $region43: #{tpu_custom_call.1} parent=31 // pred_region
          %s330 = ssub.s32 128, 128
          %331 = vsyncadd %s322, %s330
          %s332 = sadd.s32 %s25, %s26
          %s333 = smul.addr %s332, 128
          %s334 = scalar_lea.hbm %s3, %s333
          %s336 = sshll.u32 %s325, 4
          %s337 = int_to_ptr.vmem [resolvable:$true] %s336
          %339 = dma.vmem_to_hbm [thread:$0]  %s337, 128, %s334, %s322
        $region44: #{tpu_custom_call.1} parent=31 // pred_fallthru
          _
      $region32: #{tpu_custom_call.1} parent=5 // pred_fallthru
        _
      %p340 = scmp.le.s32.totalorder 2, %s16
      // Predicated region
      $region45: #{tpu_custom_call.1} parent=5 // pred_check
        %p341 = pneg %p340
      $region46: #{tpu_custom_call.1} parent=5 // pred_check_branch
        %343 = sbr.rel (%p341) target = $region48
      $region47: #{tpu_custom_call.1} parent=5 // pred_region
        %s344 = ssub.s32 %s16, 2
        // Predicated region
        $region49: #{tpu_custom_call.1} parent=47 // pred_check
          %p345 = pneg %p137
        $region50: #{tpu_custom_call.1} parent=47 // pred_check_branch
          %347 = sbr.rel (%p345) target = $region52
        $region51: #{tpu_custom_call.1} parent=47 // pred_region
          %s348 = sand.u32 %s122, 1
          %s349 = scalar_lea.sflag [#allocation4], %s348
          %s350 = sand.u32 %s122, 1
          %s351 = smul.addr %s350, 8
          %s352 = scalar_lea.vmem [#allocation7], %s351
          %353 = dma.done %s349, 128
        $region52: #{tpu_custom_call.1} parent=47 // pred_fallthru
          _
      $region48: #{tpu_custom_call.1} parent=5 // pred_fallthru
        _
    $region6: #{tpu_custom_call.1} parent=1 // loop_footer
      %s20 = sadd.s32 1, %s16
    $region7: #{tpu_custom_call.1} parent=1 // loop_footer_branch
      %15 = sbr.rel target = $region3
    $region8: #{tpu_custom_call.1} parent=1 // loop_exit
      _
    %354 = vsyncpa [#allocation3], 1
    %s355 = scalar_lea.sflag [#allocation3], 1
    %356 = vsyncpa %s355, 1
    %357 = vsyncpa [#allocation6], 1
    %358 = vsyncpa [#allocation4], 1
    %s359 = scalar_lea.sflag [#allocation4], 1
    %360 = vsyncpa %s359, 1

</llo_original>
